<compile_context>
chip_gen: v5e
topology: v5e:2x2
jax: 0.10.0
libtpu: 0.0.40
codegen_flags: <defaults>
</compile_context>

<pallas_src>
import jax
import jax.numpy as jnp
from jax.experimental import pallas as pl
from jax.experimental.pallas import tpu as pltpu

HID = 64        # hid_dim
NLAYERS = 2     # n_layers
IN_DIM = 1      # input_dim


def encoder_kernel(x_ref, wih0_ref, w0_ref, b0_ref, w1_ref, b1_ref, hc_ref):
    T = x_ref.shape[0]
    B = x_ref.shape[1]
    H = HID

    # Weights resident in VMEM for the whole sequence; bf16 -> f32 cast hoisted
    # out of the timestep loop.
    wih0 = wih0_ref[...]                          # (1, 4H)  f32
    w0 = w0_ref[...].astype(jnp.float32)          # (2H, 4H) = [W_hh0 ; 0]
    w1 = w1_ref[...].astype(jnp.float32)          # (2H, 4H) = [W_ih1 ; W_hh1]
    b0 = b0_ref[...]                              # (1, 4H)  f32 (b_ih0 + b_hh0)
    b1 = b1_ref[...]                              # (1, 4H)  f32 (b_ih1 + b_hh1)

    def lstm_update(gates, c_prev):
        # PyTorch gate order: i, f, g, o
        i = jax.nn.sigmoid(gates[:, 0 * H:1 * H])
        f = jax.nn.sigmoid(gates[:, 1 * H:2 * H])
        g = jnp.tanh(gates[:, 2 * H:3 * H])
        o = jax.nn.sigmoid(gates[:, 3 * H:4 * H])
        c_new = f * c_prev + i * g
        h_new = o * jnp.tanh(c_new)
        return h_new, c_new

    def step(t, carry):
        h_all, c_all = carry                      # (B, 2H) lane-dense [l0 | l1]
        x_t = x_ref[t]                            # (B, 1)

        # ---- layer 0: one K=2H matmul (rows H:2H of w0 are zero) ----
        g0 = (jnp.dot(h_all, w0, preferred_element_type=jnp.float32)
              + x_t * wih0 + b0)                  # (B, 4H)
        h0n, c0n = lstm_update(g0, c_all[:, 0:H])

        # ---- layer 1: fused [h0n | h1_prev] @ [W_ih1 ; W_hh1] ----
        # (inter-layer dropout on h0n is an eval-mode no-op)
        h_mid = jnp.concatenate([h0n, h_all[:, H:2 * H]], axis=-1)   # (B, 2H)
        g1 = jnp.dot(h_mid, w1, preferred_element_type=jnp.float32) + b1
        h1n, c1n = lstm_update(g1, c_all[:, H:2 * H])

        h_new = jnp.concatenate([h0n, h1n], axis=-1)
        c_new = jnp.concatenate([c0n, c1n], axis=-1)
        return h_new, c_new

    h_init = jnp.zeros((B, 2 * H), jnp.float32)
    c_init = jnp.zeros((B, 2 * H), jnp.float32)
    h_fin, c_fin = jax.lax.fori_loop(0, T, step, (h_init, c_init))

    # Fused lane-dense output slab: [h_layer0 | h_layer1 | c_layer0 | c_layer1]
    hc_ref[...] = jnp.concatenate([h_fin, c_fin], axis=-1)


def encoder_forward(x, params):
    """x: (T, B, IN_DIM) float32.  Returns (hidden, cell), each (NLAYERS, B, HID)."""
    T, B, _ = x.shape
    vm = pl.BlockSpec(memory_space=pltpu.MemorySpace.VMEM)
    hc = pl.pallas_call(
        encoder_kernel,
        out_shape=jax.ShapeDtypeStruct((B, 4 * HID), jnp.float32),
        in_specs=[vm] * 6,
        out_specs=vm,
    )(x, params["wih0"], params["w0"], params["b0"],
      params["w1"], params["b1"])
    hidden = jnp.stack([hc[:, 0 * HID:1 * HID], hc[:, 1 * HID:2 * HID]], axis=0)
    cell = jnp.stack([hc[:, 2 * HID:3 * HID], hc[:, 3 * HID:4 * HID]], axis=0)
    return hidden, cell


def ref_forward(x, wih0, whh0, b0, wih1, whh1, b1):
    """Pure-JAX reference matching PyTorch nn.LSTM (eval mode, zero init state)."""
    T, B, _ = x.shape
    H = HID
    hp = jax.lax.Precision.HIGHEST

    def cell(xin, h, c, wih, whh, b):
        g = jnp.dot(xin, wih, precision=hp) + jnp.dot(h, whh, precision=hp) + b
        i = jax.nn.sigmoid(g[:, :H])
        f = jax.nn.sigmoid(g[:, H:2 * H])
        gg = jnp.tanh(g[:, 2 * H:3 * H])
        o = jax.nn.sigmoid(g[:, 3 * H:])
        cn = f * c + i * gg
        return o * jnp.tanh(cn), cn

    h0 = jnp.zeros((B, H), jnp.float32)
    c0 = jnp.zeros((B, H), jnp.float32)
    h1 = jnp.zeros((B, H), jnp.float32)
    c1 = jnp.zeros((B, H), jnp.float32)
    for t in range(T):
        h0, c0 = cell(x[t], h0, c0, wih0, whh0, b0)
        h1, c1 = cell(h0, h1, c1, wih1, whh1, b1)   # dropout: eval no-op
    return jnp.stack([h0, h1]), jnp.stack([c0, c1])


if __name__ == "__main__":
    key = jax.random.PRNGKey(0)
    T, B = 8, 8
    keys = jax.random.split(key, 12)
    k = 1.0 / jnp.sqrt(jnp.float32(HID))

    def u(kk, shape):
        return jax.random.uniform(kk, shape, jnp.float32, -k, k)

    # PyTorch-style parameters, pre-transposed to (in_features, 4*HID) layout;
    # biases combined (b_ih + b_hh).
    wih0 = u(keys[0], (IN_DIM, 4 * HID))
    whh0 = u(keys[1], (HID, 4 * HID))
    b0 = u(keys[2], (1, 4 * HID)) + u(keys[3], (1, 4 * HID))
    wih1 = u(keys[4], (HID, 4 * HID))
    whh1 = u(keys[5], (HID, 4 * HID))
    b1 = u(keys[6], (1, 4 * HID)) + u(keys[7], (1, 4 * HID))

    # Kernel-side packing: K=128 stacked weights, big matrices stored bf16.
    w0_stacked = jnp.concatenate(
        [whh0, jnp.zeros((HID, 4 * HID), jnp.float32)], axis=0).astype(jnp.bfloat16)
    w1_stacked = jnp.concatenate([wih1, whh1], axis=0).astype(jnp.bfloat16)
    params = dict(wih0=wih0, w0=w0_stacked, b0=b0, w1=w1_stacked, b1=b1)

    x = jax.random.normal(keys[8], (T, B, IN_DIM), jnp.float32)

    hidden, cell = encoder_forward(x, params)
    jax.block_until_ready((hidden, cell))

    # Reference uses the exact bf16-rounded weight values the kernel sees.
    whh0_r = w0_stacked[:HID].astype(jnp.float32)
    wih1_r = w1_stacked[:HID].astype(jnp.float32)
    whh1_r = w1_stacked[HID:].astype(jnp.float32)
    hidden_r, cell_r = ref_forward(x, wih0, whh0_r, b0, wih1_r, whh1_r, b1)

    assert hidden.shape == (NLAYERS, B, HID) and cell.shape == (NLAYERS, B, HID)
    assert jnp.allclose(hidden, hidden_r, atol=1e-3, rtol=1e-3), "hidden mismatch"
    assert jnp.allclose(cell, cell_r, atol=1e-3, rtol=1e-3), "cell mismatch"

    print("KERNEL_OK")
</pallas_src>

<mosaic_0001>
module attributes {stable_mosaic.version = 11 : i64} {
  func.func @encoder_kernel(%arg0: memref<8x8x1xf32, #tpu.memory_space<vmem>>, %arg1: memref<1x256xf32, #tpu.memory_space<vmem>>, %arg2: memref<128x256xbf16, #tpu.memory_space<vmem>>, %arg3: memref<1x256xf32, #tpu.memory_space<vmem>>, %arg4: memref<128x256xbf16, #tpu.memory_space<vmem>>, %arg5: memref<1x256xf32, #tpu.memory_space<vmem>>, %arg6: memref<8x256xf32, #tpu.memory_space<vmem>>) attributes {dimension_semantics = [], scalar_prefetch = 0 : i64, scratch_operands = 0 : i64, tpu.core_type = #tpu.core_type<tc>} {
    %c0 = arith.constant 0 : index
    %c0_0 = arith.constant 0 : index
    %0 = vector.load %arg1[%c0, %c0_0] : memref<1x256xf32, #tpu.memory_space<vmem>>, vector<1x256xf32>
    %c0_1 = arith.constant 0 : index
    %c0_2 = arith.constant 0 : index
    %1 = vector.load %arg2[%c0_1, %c0_2] : memref<128x256xbf16, #tpu.memory_space<vmem>>, vector<128x256xbf16>
    %2 = arith.extf %1 : vector<128x256xbf16> to vector<128x256xf32>
    %c0_3 = arith.constant 0 : index
    %c0_4 = arith.constant 0 : index
    %3 = vector.load %arg4[%c0_3, %c0_4] : memref<128x256xbf16, #tpu.memory_space<vmem>>, vector<128x256xbf16>
    %4 = arith.extf %3 : vector<128x256xbf16> to vector<128x256xf32>
    %c0_5 = arith.constant 0 : index
    %c0_6 = arith.constant 0 : index
    %5 = vector.load %arg3[%c0_5, %c0_6] : memref<1x256xf32, #tpu.memory_space<vmem>>, vector<1x256xf32>
    %c0_7 = arith.constant 0 : index
    %c0_8 = arith.constant 0 : index
    %6 = vector.load %arg5[%c0_7, %c0_8] : memref<1x256xf32, #tpu.memory_space<vmem>>, vector<1x256xf32>
    %cst = arith.constant 0.000000e+00 : f32
    %7 = vector.broadcast %cst : f32 to vector<8x128xf32>
    %cst_9 = arith.constant 0.000000e+00 : f32
    %8 = vector.broadcast %cst_9 : f32 to vector<8x128xf32>
    %c0_i32 = arith.constant 0 : i32
    %c8_i32 = arith.constant 8 : i32
    %9 = arith.addi %c0_i32, %c8_i32 : i32
    %c1_i32 = arith.constant 1 : i32
    %10:2 = scf.for %arg7 = %c0_i32 to %9 step %c1_i32 iter_args(%arg8 = %7, %arg9 = %8) -> (vector<8x128xf32>, vector<8x128xf32>)  : i32 {
      %13 = arith.index_cast %arg7 : i32 to index
      %c0_13 = arith.constant 0 : index
      %c0_14 = arith.constant 0 : index
      %14 = vector.load %arg0[%13, %c0_13, %c0_14] : memref<8x8x1xf32, #tpu.memory_space<vmem>>, vector<1x8x1xf32>
      %15 = vector.shape_cast %14 : vector<1x8x1xf32> to vector<8x1xf32>
      %cst_15 = arith.constant dense<0.000000e+00> : vector<8x256xf32>
      %16 = tpu.matmul %arg8, %2, %cst_15 {dimension_numbers = #tpu.dot_dimension_numbers<[1], [0], [0], [1], [0, 0, 1, 1], [], []>} : vector<8x128xf32>, vector<128x256xf32>, vector<8x256xf32> -> vector<8x256xf32>
      %17 = vector.broadcast %15 : vector<8x1xf32> to vector<8x256xf32>
      %18 = vector.broadcast %0 : vector<1x256xf32> to vector<8x256xf32>
      %19 = arith.mulf %17, %18 : vector<8x256xf32>
      %20 = arith.addf %16, %19 : vector<8x256xf32>
      %21 = vector.broadcast %5 : vector<1x256xf32> to vector<8x256xf32>
      %22 = arith.addf %20, %21 : vector<8x256xf32>
      %23 = vector.extract_strided_slice %arg9 {offsets = [0, 0], sizes = [8, 64], strides = [1, 1]} : vector<8x128xf32> to vector<8x64xf32>
      %24 = vector.extract_strided_slice %22 {offsets = [0, 0], sizes = [8, 64], strides = [1, 1]} : vector<8x256xf32> to vector<8x64xf32>
      %25 = arith.negf %24 : vector<8x64xf32>
      %26 = math.exp %25 : vector<8x64xf32>
      %cst_16 = arith.constant 1.000000e+00 : f32
      %27 = vector.broadcast %cst_16 : f32 to vector<8x64xf32>
      %28 = arith.addf %27, %26 : vector<8x64xf32>
      %29 = arith.divf %27, %28 : vector<8x64xf32>
      %30 = vector.extract_strided_slice %22 {offsets = [0, 64], sizes = [8, 64], strides = [1, 1]} : vector<8x256xf32> to vector<8x64xf32>
      %31 = arith.negf %30 : vector<8x64xf32>
      %32 = math.exp %31 : vector<8x64xf32>
      %cst_17 = arith.constant 1.000000e+00 : f32
      %33 = vector.broadcast %cst_17 : f32 to vector<8x64xf32>
      %34 = arith.addf %33, %32 : vector<8x64xf32>
      %35 = arith.divf %33, %34 : vector<8x64xf32>
      %36 = vector.extract_strided_slice %22 {offsets = [0, 128], sizes = [8, 64], strides = [1, 1]} : vector<8x256xf32> to vector<8x64xf32>
      %37 = math.tanh %36 : vector<8x64xf32>
      %38 = vector.extract_strided_slice %22 {offsets = [0, 192], sizes = [8, 64], strides = [1, 1]} : vector<8x256xf32> to vector<8x64xf32>
      %39 = arith.negf %38 : vector<8x64xf32>
      %40 = math.exp %39 : vector<8x64xf32>
      %cst_18 = arith.constant 1.000000e+00 : f32
      %41 = vector.broadcast %cst_18 : f32 to vector<8x64xf32>
      %42 = arith.addf %41, %40 : vector<8x64xf32>
      %43 = arith.divf %41, %42 : vector<8x64xf32>
      %44 = arith.mulf %35, %23 : vector<8x64xf32>
      %45 = arith.mulf %29, %37 : vector<8x64xf32>
      %46 = arith.addf %44, %45 : vector<8x64xf32>
      %47 = math.tanh %46 : vector<8x64xf32>
      %48 = arith.mulf %43, %47 : vector<8x64xf32>
      %49 = vector.extract_strided_slice %arg8 {offsets = [0, 64], sizes = [8, 64], strides = [1, 1]} : vector<8x128xf32> to vector<8x64xf32>
      %50 = tpu.concatenate %48, %49 in 1 : vector<8x64xf32>, vector<8x64xf32> -> vector<8x128xf32>
      %cst_19 = arith.constant dense<0.000000e+00> : vector<8x256xf32>
      %51 = tpu.matmul %50, %4, %cst_19 {dimension_numbers = #tpu.dot_dimension_numbers<[1], [0], [0], [1], [0, 0, 1, 1], [], []>} : vector<8x128xf32>, vector<128x256xf32>, vector<8x256xf32> -> vector<8x256xf32>
      %52 = vector.broadcast %6 : vector<1x256xf32> to vector<8x256xf32>
      %53 = arith.addf %51, %52 : vector<8x256xf32>
      %54 = vector.extract_strided_slice %arg9 {offsets = [0, 64], sizes = [8, 64], strides = [1, 1]} : vector<8x128xf32> to vector<8x64xf32>
      %55 = vector.extract_strided_slice %53 {offsets = [0, 0], sizes = [8, 64], strides = [1, 1]} : vector<8x256xf32> to vector<8x64xf32>
      %56 = arith.negf %55 : vector<8x64xf32>
      %57 = math.exp %56 : vector<8x64xf32>
      %cst_20 = arith.constant 1.000000e+00 : f32
      %58 = vector.broadcast %cst_20 : f32 to vector<8x64xf32>
      %59 = arith.addf %58, %57 : vector<8x64xf32>
      %60 = arith.divf %58, %59 : vector<8x64xf32>
      %61 = vector.extract_strided_slice %53 {offsets = [0, 64], sizes = [8, 64], strides = [1, 1]} : vector<8x256xf32> to vector<8x64xf32>
      %62 = arith.negf %61 : vector<8x64xf32>
      %63 = math.exp %62 : vector<8x64xf32>
      %cst_21 = arith.constant 1.000000e+00 : f32
      %64 = vector.broadcast %cst_21 : f32 to vector<8x64xf32>
      %65 = arith.addf %64, %63 : vector<8x64xf32>
      %66 = arith.divf %64, %65 : vector<8x64xf32>
      %67 = vector.extract_strided_slice %53 {offsets = [0, 128], sizes = [8, 64], strides = [1, 1]} : vector<8x256xf32> to vector<8x64xf32>
      %68 = math.tanh %67 : vector<8x64xf32>
      %69 = vector.extract_strided_slice %53 {offsets = [0, 192], sizes = [8, 64], strides = [1, 1]} : vector<8x256xf32> to vector<8x64xf32>
      %70 = arith.negf %69 : vector<8x64xf32>
      %71 = math.exp %70 : vector<8x64xf32>
      %cst_22 = arith.constant 1.000000e+00 : f32
      %72 = vector.broadcast %cst_22 : f32 to vector<8x64xf32>
      %73 = arith.addf %72, %71 : vector<8x64xf32>
      %74 = arith.divf %72, %73 : vector<8x64xf32>
      %75 = arith.mulf %66, %54 : vector<8x64xf32>
      %76 = arith.mulf %60, %68 : vector<8x64xf32>
      %77 = arith.addf %75, %76 : vector<8x64xf32>
      %78 = math.tanh %77 : vector<8x64xf32>
      %79 = arith.mulf %74, %78 : vector<8x64xf32>
      %80 = tpu.concatenate %48, %79 in 1 : vector<8x64xf32>, vector<8x64xf32> -> vector<8x128xf32>
      %81 = tpu.concatenate %46, %77 in 1 : vector<8x64xf32>, vector<8x64xf32> -> vector<8x128xf32>
      scf.yield %80, %81 : vector<8x128xf32>, vector<8x128xf32>
    }
    %c8_i32_10 = arith.constant 8 : i32
    %11 = tpu.concatenate %10#0, %10#1 in 1 : vector<8x128xf32>, vector<8x128xf32> -> vector<8x256xf32>
    %c0_11 = arith.constant 0 : index
    %c0_12 = arith.constant 0 : index
    %12 = vector.load %arg6[%c0_11, %c0_12] : memref<8x256xf32, #tpu.memory_space<vmem>>, vector<8x256xf32>
    tpu.vector_store %arg6[%c0_11, %c0_12], %11 {strides = array<i32>} : memref<8x256xf32, #tpu.memory_space<vmem>>, vector<8x256xf32>,
    return
  }
}

</mosaic_0001>

<llo_original>
// kernel: tpu_custom_call.1
$region0: #{tpu_custom_call.1}
  #allocation0 [shape = 'u32[]', space=smem, size = 0x4, offset = 0x4, fixed_abs, tag = 'smem constant byte address 0x4 - core index']
  #allocation1 [shape = 'u32[72,128]{1,0:T(1,128)}', space=vmem, size = 0x9000, scoped, tag = 'internal scratch']
  %s0 = inlined_call_operand.vmem [shape: f32[8,8,1], index: 0, kind: input, shape index: {}]
  %s1 = inlined_call_operand.vmem [shape: f32[1,256], index: 1, kind: input, shape index: {}]
  %s2 = inlined_call_operand.hbm [shape: bf16[128,256], index: 2, kind: input, shape index: {}]
  %s3 = inlined_call_operand.vmem [shape: f32[1,256], index: 3, kind: input, shape index: {}]
  %s4 = inlined_call_operand.hbm [shape: bf16[128,256], index: 4, kind: input, shape index: {}]
  %s5 = inlined_call_operand.vmem [shape: f32[1,256], index: 5, kind: input, shape index: {}]
  %s6 = inlined_call_operand.hbm [shape: f32[8,256], index: 6, kind: output, shape index: {}]
  %s7 = sld [smem:[#allocation0]]
  $region49: #{tpu_custom_call.1} parent=0
    _
  %s9 = ssub.s32 1, %s7
  %s10 = scalar_select 0, %s9, %s7
  $region1: #{tpu_custom_call.1} parent=0
    #allocation2 [shape = 'u8[65536]{0}', space=vmem, size = 0x10000, scoped, tag = 'input window, operand 2, single buffered']
    #allocation3 [shape = 's32[1]{0}', space=sflag, size = 0x4, scoped, tag = 'scoped memory for tpu_custom_call.1']
    #allocation4 [shape = 's32[1]{0}', space=sflag, size = 0x4, scoped, tag = 'scoped memory for tpu_custom_call.1']
    #allocation5 [shape = 'u8[65536]{0}', space=vmem, size = 0x10000, scoped, tag = 'input window, operand 4, single buffered']
    #allocation6 [shape = 's32[1]{0}', space=sflag, size = 0x4, scoped, tag = 'scoped memory for tpu_custom_call.1']
    #allocation7 [shape = 'u8[8192]{0}', space=vmem, size = 0x2000, scoped, tag = 'output window, operand 0, single buffered']
    %11 = vsyncpa [#allocation3], 0
    %12 = vsyncpa [#allocation6], 0
    %13 = vsyncpa [#allocation4], 0
    // Predicated region
    $region2: #{tpu_custom_call.1} parent=1 // pred_check
      _
    $region3: #{tpu_custom_call.1} parent=1 // pred_check_branch
      %15 = sbr.rel (0) target = $region5
    $region4: #{tpu_custom_call.1} parent=1 // pred_region
      _
    $region5: #{tpu_custom_call.1} parent=1 // pred_fallthru
      _
    // Predicated region
    $region6: #{tpu_custom_call.1} parent=1 // pred_check
      _
    $region7: #{tpu_custom_call.1} parent=1 // pred_check_branch
      %17 = sbr.rel (0) target = $region9
    $region8: #{tpu_custom_call.1} parent=1 // pred_region
      _
    $region9: #{tpu_custom_call.1} parent=1 // pred_fallthru
      _
    // Predicated region
    $region10: #{tpu_custom_call.1} parent=1 // pred_check
      _
    $region11: #{tpu_custom_call.1} parent=1 // pred_check_branch
      %19 = sbr.rel (0) target = $region13
    $region12: #{tpu_custom_call.1} parent=1 // pred_region
      %21 = vsyncadd [#allocation3], 0
      %s22 = sshll.u32 %s2, 4
      %s23 = int_to_ptr.hbm [resolvable:$true] %s22
      %s24 = sshll.u32 [#allocation2], 4
      %s25 = int_to_ptr.vmem [resolvable:$true] %s24
      %30 = dma.hbm_to_vmem [thread:$0]  %s23, 2048, %s25, [#allocation3], 128, 128, 8
    $region13: #{tpu_custom_call.1} parent=1 // pred_fallthru
      _
    // Predicated region
    $region14: #{tpu_custom_call.1} parent=1 // pred_check
      _
    $region15: #{tpu_custom_call.1} parent=1 // pred_check_branch
      %32 = sbr.rel (0) target = $region17
    $region16: #{tpu_custom_call.1} parent=1 // pred_region
      _
    $region17: #{tpu_custom_call.1} parent=1 // pred_fallthru
      _
    // Predicated region
    $region18: #{tpu_custom_call.1} parent=1 // pred_check
      _
    $region19: #{tpu_custom_call.1} parent=1 // pred_check_branch
      %34 = sbr.rel (0) target = $region21
    $region20: #{tpu_custom_call.1} parent=1 // pred_region
      %36 = vsyncadd [#allocation6], 0
      %s37 = sshll.u32 %s4, 4
      %s38 = int_to_ptr.hbm [resolvable:$true] %s37
      %s39 = sshll.u32 [#allocation5], 4
      %s40 = int_to_ptr.vmem [resolvable:$true] %s39
      %45 = dma.hbm_to_vmem [thread:$0]  %s38, 2048, %s40, [#allocation6], 128, 128, 8
    $region21: #{tpu_custom_call.1} parent=1 // pred_fallthru
      _
    // Predicated region
    $region22: #{tpu_custom_call.1} parent=1 // pred_check
      _
    $region23: #{tpu_custom_call.1} parent=1 // pred_check_branch
      %47 = sbr.rel (0) target = $region25
    $region24: #{tpu_custom_call.1} parent=1 // pred_region
      _
    $region25: #{tpu_custom_call.1} parent=1 // pred_fallthru
      _
    // Predicated region
    $region26: #{tpu_custom_call.1} parent=1 // pred_check
      _
    $region27: #{tpu_custom_call.1} parent=1 // pred_check_branch
      %49 = sbr.rel (0) target = $region29
    $region28: #{tpu_custom_call.1} parent=1 // pred_region
      %51 = dma.done [#allocation3], 2048
    $region29: #{tpu_custom_call.1} parent=1 // pred_fallthru
      _
    // Predicated region
    $region30: #{tpu_custom_call.1} parent=1 // pred_check
      _
    $region31: #{tpu_custom_call.1} parent=1 // pred_check_branch
      %53 = sbr.rel (0) target = $region33
    $region32: #{tpu_custom_call.1} parent=1 // pred_region
      %55 = dma.done [#allocation6], 2048
    $region33: #{tpu_custom_call.1} parent=1 // pred_fallthru
      _
    %v56 = vld [vmem:[%s1] sm:$0x3]
    %v57 = vld [vmem:[#allocation2] sm:$0xff]
    %v58 = vld [vmem:[#allocation2 + $0x8] sm:$0xff]
    %v59 = vld [vmem:[#allocation2 + $0x10] sm:$0xff]
    %v60 = vld [vmem:[#allocation2 + $0x18] sm:$0xff]
    %v61 = vld [vmem:[#allocation2 + $0x20] sm:$0xff]
    %v62 = vld [vmem:[#allocation2 + $0x28] sm:$0xff]
    %v63 = vld [vmem:[#allocation2 + $0x30] sm:$0xff]
    %v64 = vld [vmem:[#allocation2 + $0x38] sm:$0xff]
    %v65 = vld [vmem:[#allocation2 + $0x40] sm:$0xff]
    %v66 = vld [vmem:[#allocation2 + $0x48] sm:$0xff]
    %v67 = vld [vmem:[#allocation2 + $0x50] sm:$0xff]
    %v68 = vld [vmem:[#allocation2 + $0x58] sm:$0xff]
    %v69 = vld [vmem:[#allocation2 + $0x60] sm:$0xff]
    %v70 = vld [vmem:[#allocation2 + $0x68] sm:$0xff]
    %v71 = vld [vmem:[#allocation2 + $0x70] sm:$0xff]
    %v72 = vld [vmem:[#allocation2 + $0x78] sm:$0xff]
    %v73 = vunpack.c.l.bf16 %v57
    %v74 = vunpack.c.h.bf16 %v57
    %v75 = vunpack.c.l.bf16 %v58
    %v76 = vunpack.c.h.bf16 %v58
    %v77 = vunpack.c.l.bf16 %v59
    %v78 = vunpack.c.h.bf16 %v59
    %v79 = vunpack.c.l.bf16 %v60
    %v80 = vunpack.c.h.bf16 %v60
    %v81 = vunpack.c.l.bf16 %v61
    %v82 = vunpack.c.h.bf16 %v61
    %v83 = vunpack.c.l.bf16 %v62
    %v84 = vunpack.c.h.bf16 %v62
    %v85 = vunpack.c.l.bf16 %v63
    %v86 = vunpack.c.h.bf16 %v63
    %v87 = vunpack.c.l.bf16 %v64
    %v88 = vunpack.c.h.bf16 %v64
    %v89 = vunpack.c.l.bf16 %v65
    %v90 = vunpack.c.h.bf16 %v65
    %v91 = vunpack.c.l.bf16 %v66
    %v92 = vunpack.c.h.bf16 %v66
    %v93 = vunpack.c.l.bf16 %v67
    %v94 = vunpack.c.h.bf16 %v67
    %v95 = vunpack.c.l.bf16 %v68
    %v96 = vunpack.c.h.bf16 %v68
    %v97 = vunpack.c.l.bf16 %v69
    %v98 = vunpack.c.h.bf16 %v69
    %v99 = vunpack.c.l.bf16 %v70
    %v100 = vunpack.c.h.bf16 %v70
    %v101 = vunpack.c.l.bf16 %v71
    %v102 = vunpack.c.h.bf16 %v71
    %v103 = vunpack.c.l.bf16 %v72
    %v104 = vunpack.c.h.bf16 %v72
    %v105 = vld [vmem:[#allocation5] sm:$0xff]
    %v106 = vld [vmem:[#allocation5 + $0x8] sm:$0xff]
    %v107 = vld [vmem:[#allocation5 + $0x10] sm:$0xff]
    %v108 = vld [vmem:[#allocation5 + $0x18] sm:$0xff]
    %v109 = vld [vmem:[#allocation5 + $0x20] sm:$0xff]
    %v110 = vld [vmem:[#allocation5 + $0x28] sm:$0xff]
    %v111 = vld [vmem:[#allocation5 + $0x30] sm:$0xff]
    %v112 = vld [vmem:[#allocation5 + $0x38] sm:$0xff]
    %v113 = vld [vmem:[#allocation5 + $0x40] sm:$0xff]
    %v114 = vld [vmem:[#allocation5 + $0x48] sm:$0xff]
    %v115 = vld [vmem:[#allocation5 + $0x50] sm:$0xff]
    %v116 = vld [vmem:[#allocation5 + $0x58] sm:$0xff]
    %v117 = vld [vmem:[#allocation5 + $0x60] sm:$0xff]
    %v118 = vld [vmem:[#allocation5 + $0x68] sm:$0xff]
    %v119 = vld [vmem:[#allocation5 + $0x70] sm:$0xff]
    %v120 = vld [vmem:[#allocation5 + $0x78] sm:$0xff]
    %v121 = vunpack.c.l.bf16 %v105
    %v122 = vunpack.c.h.bf16 %v105
    %v123 = vunpack.c.l.bf16 %v106
    %v124 = vunpack.c.h.bf16 %v106
    %v125 = vunpack.c.l.bf16 %v107
    %v126 = vunpack.c.h.bf16 %v107
    %v127 = vunpack.c.l.bf16 %v108
    %v128 = vunpack.c.h.bf16 %v108
    %v129 = vunpack.c.l.bf16 %v109
    %v130 = vunpack.c.h.bf16 %v109
    %v131 = vunpack.c.l.bf16 %v110
    %v132 = vunpack.c.h.bf16 %v110
    %v133 = vunpack.c.l.bf16 %v111
    %v134 = vunpack.c.h.bf16 %v111
    %v135 = vunpack.c.l.bf16 %v112
    %v136 = vunpack.c.h.bf16 %v112
    %v137 = vunpack.c.l.bf16 %v113
    %v138 = vunpack.c.h.bf16 %v113
    %v139 = vunpack.c.l.bf16 %v114
    %v140 = vunpack.c.h.bf16 %v114
    %v141 = vunpack.c.l.bf16 %v115
    %v142 = vunpack.c.h.bf16 %v115
    %v143 = vunpack.c.l.bf16 %v116
    %v144 = vunpack.c.h.bf16 %v116
    %v145 = vunpack.c.l.bf16 %v117
    %v146 = vunpack.c.h.bf16 %v117
    %v147 = vunpack.c.l.bf16 %v118
    %v148 = vunpack.c.h.bf16 %v118
    %v149 = vunpack.c.l.bf16 %v119
    %v150 = vunpack.c.h.bf16 %v119
    %v151 = vunpack.c.l.bf16 %v120
    %v152 = vunpack.c.h.bf16 %v120
    %v153 = vld [vmem:[%s3] sm:$0x3]
    %v154 = vld [vmem:[%s5] sm:$0x3]
    loop: start=0, step=1, limit=8
    $region34: #{tpu_custom_call.1} parent=1 // loop_pre_header
      _
    $region35: #{tpu_custom_call.1} parent=1 // loop_header
      %s156 = sphi 0, %s160
      %p157 = scmp.ge.s32.totalorder %s156, 8
      %v161 = vphi 0.0, %v376
      %v162 = vphi 0.0, %v381
    $region36: #{tpu_custom_call.1} parent=1 // loop_header_branch
      %159 = sbr.rel (%p157) target = $region40
    $region37: #{tpu_custom_call.1} parent=1 // loop_body
      %s163 = smul.u32 %s156, 8
      %s164 = scalar_lea.vmem %s0, %s163
      %v165 = vld [vmem:[%s164] sm:$0xff]
      %167 = vset.pattern.permute.xlu0 0
      %168 = vperm.xlu0 %167, %v165
      %v169 = vpop.permute.xlu0 %168
      %v172 = vperm.slane %v56, 0
      %v173 = vperm.slane %v56, 1
      %v176 = vmul.f32 %v169, %v172
      %v177 = vmul.f32 %v169, %v173
      %178 = vmatpush.msra.mxu0 %v103
      %179 = vmatpush.msra.mxu0 %v101
      %180 = vmatpush.msra.mxu0 %v99
      %181 = vmatpush.msra.mxu0 %v97
      %182 = vmatpush.msra.mxu0 %v95
      %183 = vmatpush.msra.mxu0 %v93
      %184 = vmatpush.msra.mxu0 %v91
      %185 = vmatpush.msra.mxu0 %v89
      %186 = vmatpush.msra.mxu0 %v87
      %187 = vmatpush.msra.mxu0 %v85
      %188 = vmatpush.msra.mxu0 %v83
      %189 = vmatpush.msra.mxu0 %v81
      %190 = vmatpush.msra.mxu0 %v79
      %191 = vmatpush.msra.mxu0 %v77
      %192 = vmatpush.msra.mxu0 %v75
      %193 = vmatpush.msra.mxu0 %v73
      %194 = vmatmul.f32.gmra.mxu0 %v161
      %v195 = vpop.f32.mrf.mxu0
      %v196 = vadd.f32 %v176, %v195
      %197 = vdwg.mxu0
      %198 = vmatpush.msra.mxu0 %v104
      %199 = vmatpush.msra.mxu0 %v102
      %200 = vmatpush.msra.mxu0 %v100
      %201 = vmatpush.msra.mxu0 %v98
      %202 = vmatpush.msra.mxu0 %v96
      %203 = vmatpush.msra.mxu0 %v94
      %204 = vmatpush.msra.mxu0 %v92
      %205 = vmatpush.msra.mxu0 %v90
      %206 = vmatpush.msra.mxu0 %v88
      %207 = vmatpush.msra.mxu0 %v86
      %208 = vmatpush.msra.mxu0 %v84
      %209 = vmatpush.msra.mxu0 %v82
      %210 = vmatpush.msra.mxu0 %v80
      %211 = vmatpush.msra.mxu0 %v78
      %212 = vmatpush.msra.mxu0 %v76
      %213 = vmatpush.msra.mxu0 %v74
      %214 = vmatmul.f32.gmra.mxu0 %v161
      %v215 = vpop.f32.mrf.mxu0
      %v216 = vadd.f32 %v177, %v215
      %217 = vdwg.mxu0
      %v219 = vperm.slane %v153, 0
      %v220 = vperm.slane %v153, 1
      %v223 = vadd.f32 %v196, %v219
      %v224 = vadd.f32 %v216, %v220
      %v225 = vxor.u32 %v223, 2147483648
      %v226 = vmul.f32 %v225, 1.442695
      %v227 = vpow.pop %v226
      %v228 = vadd.f32 %v227, 1.0
      %v229 = vrcp.pop %v228
      %v230 = vmul.f32 %v228, %v229
      %v231 = vsub.f32 1.0, %v230
      %v232 = vmul.f32 %v229, %v231
      %v233 = vadd.f32 %v229, %v232
      %vm234 = vweird.f32 %v228
      %vm235 = vweird.f32 %v229
      %vm236 = vmor %vm234, %vm235
      %v237 = vsel %vm236, %v229, %v233
      %v238 = vand.u32 2147483647, %v228
      %vm239 = vcmp.eq.f32.partialorder %v238, 8.507059e+37
      %v240 = vand.u32 %v228, 2147483648
      %v241 = vor.u32 1.1754944e-38, %v240
      %v242 = vsel %vm239, %v241, %v237
      %v243 = vmul.f32 1.0, %v242
      %v244 = vtanh.pop %v224
      %v245 = vxor.u32 %v224, 2147483648
      %v246 = vmul.f32 %v245, 1.442695
      %v247 = vpow.pop %v246
      %v248 = vadd.f32 %v247, 1.0
      %v249 = vrcp.pop %v248
      %v250 = vmul.f32 %v248, %v249
      %v251 = vsub.f32 1.0, %v250
      %v252 = vmul.f32 %v249, %v251
      %v253 = vadd.f32 %v249, %v252
      %vm254 = vweird.f32 %v248
      %vm255 = vweird.f32 %v249
      %vm256 = vmor %vm254, %vm255
      %v257 = vsel %vm256, %v249, %v253
      %v258 = vand.u32 2147483647, %v248
      %vm259 = vcmp.eq.f32.partialorder %v258, 8.507059e+37
      %v260 = vand.u32 %v248, 2147483648
      %v261 = vor.u32 1.1754944e-38, %v260
      %v262 = vsel %vm259, %v261, %v257
      %v263 = vmul.f32 1.0, %v262
      %265 = vrot.lane.b32.xlu0 %v162, 64
      %v266 = vpop.permute.xlu0 %265
      %v268 = vmul.f32 %v243, %v266
      %v269 = vmul.f32 %v243, %v244
      %271 = vrot.lane.b32.xlu0 %v269, 64
      %v272 = vpop.permute.xlu0 %271
      %v274 = vadd.f32 %v268, %v272
      %v275 = vtanh.pop %v274
      %v276 = vmul.f32 %v263, %v275
      %278 = vrot.lane.b32.xlu0 %v276, 64
      %v279 = vpop.permute.xlu0 %278
      %vm281 = vcmask 523264
      %v282 = vsel %vm281, %v279, %v161
      %v284 = vperm.slane %v154, 0
      %v285 = vperm.slane %v154, 1
      %288 = vmatpush.msra.mxu0 %v151
      %289 = vmatpush.msra.mxu0 %v149
      %290 = vmatpush.msra.mxu0 %v147
      %291 = vmatpush.msra.mxu0 %v145
      %292 = vmatpush.msra.mxu0 %v143
      %293 = vmatpush.msra.mxu0 %v141
      %294 = vmatpush.msra.mxu0 %v139
      %295 = vmatpush.msra.mxu0 %v137
      %296 = vmatpush.msra.mxu0 %v135
      %297 = vmatpush.msra.mxu0 %v133
      %298 = vmatpush.msra.mxu0 %v131
      %299 = vmatpush.msra.mxu0 %v129
      %300 = vmatpush.msra.mxu0 %v127
      %301 = vmatpush.msra.mxu0 %v125
      %302 = vmatpush.msra.mxu0 %v123
      %303 = vmatpush.msra.mxu0 %v121
      %304 = vmatmul.f32.gmra.mxu0 %v282
      %v305 = vpop.f32.mrf.mxu0
      %v306 = vadd.f32 %v284, %v305
      %307 = vdwg.mxu0
      %308 = vmatpush.msra.mxu0 %v152
      %309 = vmatpush.msra.mxu0 %v150
      %310 = vmatpush.msra.mxu0 %v148
      %311 = vmatpush.msra.mxu0 %v146
      %312 = vmatpush.msra.mxu0 %v144
      %313 = vmatpush.msra.mxu0 %v142
      %314 = vmatpush.msra.mxu0 %v140
      %315 = vmatpush.msra.mxu0 %v138
      %316 = vmatpush.msra.mxu0 %v136
      %317 = vmatpush.msra.mxu0 %v134
      %318 = vmatpush.msra.mxu0 %v132
      %319 = vmatpush.msra.mxu0 %v130
      %320 = vmatpush.msra.mxu0 %v128
      %321 = vmatpush.msra.mxu0 %v126
      %322 = vmatpush.msra.mxu0 %v124
      %323 = vmatpush.msra.mxu0 %v122
      %324 = vmatmul.f32.gmra.mxu0 %v282
      %v325 = vpop.f32.mrf.mxu0
      %v326 = vadd.f32 %v285, %v325
      %327 = vdwg.mxu0
      %v328 = vxor.u32 %v306, 2147483648
      %v329 = vmul.f32 %v328, 1.442695
      %v330 = vpow.pop %v329
      %v331 = vadd.f32 %v330, 1.0
      %v332 = vrcp.pop %v331
      %v333 = vmul.f32 %v331, %v332
      %v334 = vsub.f32 1.0, %v333
      %v335 = vmul.f32 %v332, %v334
      %v336 = vadd.f32 %v332, %v335
      %vm337 = vweird.f32 %v331
      %vm338 = vweird.f32 %v332
      %vm339 = vmor %vm337, %vm338
      %v340 = vsel %vm339, %v332, %v336
      %v341 = vand.u32 2147483647, %v331
      %vm342 = vcmp.eq.f32.partialorder %v341, 8.507059e+37
      %v343 = vand.u32 %v331, 2147483648
      %v344 = vor.u32 1.1754944e-38, %v343
      %v345 = vsel %vm342, %v344, %v340
      %v346 = vmul.f32 1.0, %v345
      %v347 = vtanh.pop %v326
      %v348 = vxor.u32 %v326, 2147483648
      %v349 = vmul.f32 %v348, 1.442695
      %v350 = vpow.pop %v349
      %v351 = vadd.f32 %v350, 1.0
      %v352 = vrcp.pop %v351
      %v353 = vmul.f32 %v351, %v352
      %v354 = vsub.f32 1.0, %v353
      %v355 = vmul.f32 %v352, %v354
      %v356 = vadd.f32 %v352, %v355
      %vm357 = vweird.f32 %v351
      %vm358 = vweird.f32 %v352
      %vm359 = vmor %vm357, %vm358
      %v360 = vsel %vm359, %v352, %v356
      %v361 = vand.u32 2147483647, %v351
      %vm362 = vcmp.eq.f32.partialorder %v361, 8.507059e+37
      %v363 = vand.u32 %v351, 2147483648
      %v364 = vor.u32 1.1754944e-38, %v363
      %v365 = vsel %vm362, %v364, %v360
      %v366 = vmul.f32 1.0, %v365
      %v367 = vmul.f32 %v346, %v162
      %v368 = vmul.f32 %v346, %v347
      %370 = vrot.lane.b32.xlu0 %v368, 64
      %v371 = vpop.permute.xlu0 %370
      %v373 = vadd.f32 %v367, %v371
      %v374 = vtanh.pop %v373
      %v375 = vmul.f32 %v366, %v374
      %v376 = vsel %vm281, %v279, %v375
      %378 = vrot.lane.b32.xlu0 %v274, 64
      %v379 = vpop.permute.xlu0 %378
      %v381 = vsel %vm281, %v379, %v373
    $region38: #{tpu_custom_call.1} parent=1 // loop_footer
      %s160 = sadd.s32 1, %s156
    $region39: #{tpu_custom_call.1} parent=1 // loop_footer_branch
      %155 = sbr.rel target = $region35
    $region40: #{tpu_custom_call.1} parent=1 // loop_exit
      _
    %382 = vst [vmem:[#allocation7] sm:$0xff] %v161
    %383 = vst [vmem:[#allocation7 + $0x8] sm:$0xff] %v162
    // Predicated region
    $region41: #{tpu_custom_call.1} parent=1 // pred_check
      _
    $region42: #{tpu_custom_call.1} parent=1 // pred_check_branch
      %385 = sbr.rel (0) target = $region44
    $region43: #{tpu_custom_call.1} parent=1 // pred_region
      %387 = vsyncadd [#allocation4], 0
      %s389 = sshll.u32 [#allocation7], 4
      %s390 = int_to_ptr.vmem [resolvable:$true] %s389
      %s391 = sshll.u32 %s6, 4
      %s392 = int_to_ptr.hbm [resolvable:$true] %s391
      %394 = dma.vmem_to_hbm [thread:$0]  %s390, 256, %s392, [#allocation4]
    $region44: #{tpu_custom_call.1} parent=1 // pred_fallthru
      _
    // Predicated region
    $region45: #{tpu_custom_call.1} parent=1 // pred_check
      _
    $region46: #{tpu_custom_call.1} parent=1 // pred_check_branch
      %396 = sbr.rel (0) target = $region48
    $region47: #{tpu_custom_call.1} parent=1 // pred_region
      %398 = dma.done [#allocation4], 256
    $region48: #{tpu_custom_call.1} parent=1 // pred_fallthru
      _
    %399 = vsyncpa [#allocation3], 1
    %400 = vsyncpa [#allocation6], 1
    %401 = vsyncpa [#allocation4], 1

</llo_original>
